<compile_context>
chip_gen: v5e
topology: v5e:2x2
jax: 0.10.0
libtpu: 0.0.40
codegen_flags: <defaults>
</compile_context>

<pallas_src>
import functools

import jax
import jax.numpy as jnp
from jax.experimental import pallas as pl
from jax.experimental.pallas import tpu as pltpu

LANES = 128


def _cdiv(a, b):
    return -(-a // b)


def _num_tensorcores():
    """Best-effort TensorCore count (v7x: 2 per chip); safe fallback to 2."""
    try:
        info = pltpu.get_tpu_info()
        for attr in ("num_cores", "core_count", "num_tensorcores",
                     "tensorcore_count", "cores_per_chip"):
            n = getattr(info, attr, None)
            if isinstance(n, int) and 1 <= n <= 8:
                return n
    except Exception:
        pass
    return 2


def _tile_budget(itemsize):
    """(max_block_rows, vmem_limit_bytes) per TPU generation."""
    kind = ""
    try:
        kind = jax.devices()[0].device_kind.lower()
    except Exception:
        pass
    if "v7" in kind:
        # 3.2 TB/s HBM: big tiles to amortize the ~0.35 us per-step overhead.
        per_buf, vmem_limit = 4 << 20, 32 << 20     # 2 in x 2 buf = 16 MiB
    elif "v6" in kind:
        per_buf, vmem_limit = 2 << 20, None         # 8 MiB total, default 32
    else:
        # v5e (16 MiB scoped default) or unknown: stay conservative.
        per_buf, vmem_limit = 1 << 20, None         # 4 MiB total
    return max(1, per_buf // (LANES * itemsize)), vmem_limit


def _plan_grid(rows, sub, max_block_rows, req_chunks):
    """Pick (n_chunks, blocks_per_chunk, block_rows) such that:
       * every block index is in-bounds (no clamped / duplicated DMAs),
       * at most the single final block of the grid is ragged,
       * rows split evenly across the parallel chunk axis."""
    r = _cdiv(rows, sub)                    # rows in sub-row groups
    cap = max(1, max_block_rows // sub)
    for nc in range(max(1, min(req_chunks, r)), 0, -1):
        per_chunk = _cdiv(r, nc)
        bpc = _cdiv(per_chunk, cap)
        blk = _cdiv(per_chunk, bpc)         # <= cap by construction
        g = nc * bpc
        if g * blk >= r and (g - 1) * blk < r:
            return nc, bpc, blk * sub
    blk = min(cap, r)                       # always-valid fallback
    return 1, _cdiv(r, blk), blk * sub


def _mse_kernel(pred_ref, tgt_ref, out_ref, acc_ref, *,
                rows, block_rows, bpc, acc_rows, ragged, last_block):
    """Per-chunk partial sum of (pred - tgt)^2.

    Grid = (n_chunks, blocks_per_chunk).  acc_ref is an (acc_rows, 128) f32
    accumulator (up to 4 independent vreg chains): reset at the start of each
    chunk, folded to (8, 128) and flushed to the chunk's output slot at the
    end of the chunk.
    """
    p = pl.program_id(0)
    j = pl.program_id(1)

    @pl.when(j == 0)
    def _init():
        acc_ref[...] = jnp.zeros_like(acc_ref)

    d = pred_ref[...].astype(jnp.float32) - tgt_ref[...].astype(jnp.float32)
    sq = d * d

    def _accumulate(vals):
        # (block_rows, 128) -> (block_rows//acc_rows, acc_rows, 128): the
        # axis-0 sum is pure VPU adds over acc_rows//8 independent vreg
        # accumulator chains (no per-step cross-lane XLU work).
        acc_ref[...] += jnp.sum(vals.reshape(-1, acc_rows, LANES), axis=0)

    if ragged:
        # Only the genuinely-final block of the whole grid extends past
        # `rows`; every other step takes the unmasked fast path.
        gidx = p * bpc + j

        @pl.when(gidx != last_block)
        def _fast():
            _accumulate(sq)

        @pl.when(gidx == last_block)
        def _masked():
            row = jax.lax.broadcasted_iota(jnp.int32, sq.shape, 0)
            valid = (row + last_block * block_rows) < rows
            _accumulate(jnp.where(valid, sq, 0.0))
    else:
        _accumulate(sq)

    @pl.when(j == pl.num_programs(1) - 1)
    def _flush():
        folded = jnp.sum(acc_ref[...].reshape(-1, 8, LANES), axis=0)
        out_ref[...] = folded.reshape(out_ref.shape)


def mse_loss_pallas(pred, target):
    """mean((pred - target)**2) as a Pallas TPU reduction kernel."""
    assert pred.shape == target.shape, "pred/target shape mismatch"
    assert pred.dtype == target.dtype, "pred/target dtype mismatch"
    n_elems = pred.size
    itemsize = jnp.dtype(pred.dtype).itemsize
    # Packed sublane tile: 8 rows for 32-bit, 16 for 16-bit, 32 for 8-bit.
    sub = 8 * max(1, 4 // itemsize)

    p_flat = pred.reshape(-1)
    t_flat = target.reshape(-1)
    tile_elems = sub * LANES
    if n_elems % tile_elems != 0:
        # Rare fallback: zero-pad to a whole (sub, 128) tile; zeros add 0 to
        # the sum and the mean still divides by the original n_elems.
        pad = (-n_elems) % tile_elems
        p_flat = jnp.pad(p_flat, (0, pad))
        t_flat = jnp.pad(t_flat, (0, pad))
    rows = p_flat.size // LANES
    p2 = p_flat.reshape(rows, LANES)
    t2 = t_flat.reshape(rows, LANES)

    max_block_rows, vmem_limit = _tile_budget(itemsize)
    n_chunks, bpc, block_rows = _plan_grid(rows, sub, max_block_rows,
                                           _num_tensorcores())
    last_block = n_chunks * bpc - 1
    ragged = n_chunks * bpc * block_rows > rows

    # Widest accumulator (up to 4 f32 vregs) that divides the block.
    acc_rows = 32
    while block_rows % acc_rows:
        acc_rows //= 2

    kernel = functools.partial(
        _mse_kernel, rows=rows, block_rows=block_rows, bpc=bpc,
        acc_rows=acc_rows, ragged=ragged, last_block=last_block)

    in_map = lambda p, j: (p * bpc + j, 0)

    partials = pl.pallas_call(
        kernel,
        out_shape=jax.ShapeDtypeStruct((n_chunks, 8, LANES), jnp.float32),
        grid_spec=pltpu.PrefetchScalarGridSpec(
            num_scalar_prefetch=0,
            grid=(n_chunks, bpc),
            in_specs=[
                pl.BlockSpec((block_rows, LANES), in_map),
                pl.BlockSpec((block_rows, LANES), in_map),
            ],
            out_specs=pl.BlockSpec((1, 8, LANES), lambda p, j: (p, 0, 0)),
            scratch_shapes=[pltpu.VMEM((acc_rows, LANES), jnp.float32)],
        ),
        compiler_params=pltpu.CompilerParams(
            dimension_semantics=("parallel", "arbitrary"),
            vmem_limit_bytes=vmem_limit),
    )(p2, t2)

    # TODO(synk): final fold of the tiny (n_chunks, 8, 128) partials + mean
    # scaling is left to XLA; an SMEM scalar output could remove this launch.
    return jnp.sum(partials) * (1.0 / float(n_elems))


class NamedLoss:
    """JAX/Pallas equivalent of the PyTorch NamedLoss wrapper (pure dispatch)."""

    def __init__(self, loss, name):
        self.loss = loss
        self.name = name

    def __call__(self, *args, **kwargs):
        return self.loss(*args, **kwargs)

    def __name__(self):
        return self.name


if __name__ == "__main__":
    key = jax.random.PRNGKey(0)
    k1, k2 = jax.random.split(key)
    # NCHW-shaped inputs (batch=2, channels=4, spatial=16x16)
    pred = jax.random.normal(k1, (2, 4, 16, 16), dtype=jnp.float32)
    target = jax.random.normal(k2, (2, 4, 16, 16), dtype=jnp.float32)

    named_mse = NamedLoss(loss=mse_loss_pallas, name="mse")
    out = named_mse(pred, target)
    jax.block_until_ready(out)

    # sanity-check against plain-JAX reference
    ref = jnp.mean((pred - target) ** 2)
    assert jnp.allclose(out, ref, rtol=1e-5, atol=1e-5), (out, ref)
    print("KERNEL_OK")
</pallas_src>

<mosaic_0001>
module attributes {stable_mosaic.version = 11 : i64} {
  func.func @_mse_kernel(%arg0: i32, %arg1: i32, %arg2: memref<8x128xf32, #tpu.memory_space<vmem>>, %arg3: memref<8x128xf32, #tpu.memory_space<vmem>>, %arg4: memref<1x8x128xf32, #tpu.memory_space<vmem>>, %arg5: memref<8x128xf32, #tpu.memory_space<vmem>>) attributes {dimension_semantics = [#tpu.dimension_semantics<parallel>, #tpu.dimension_semantics<arbitrary>], iteration_bounds = array<i64: 2, 1>, scalar_prefetch = 0 : i64, scratch_operands = 1 : i64, tpu.core_type = #tpu.core_type<tc>, window_params = [{transform_indices = @transform_0, window_bounds = array<i64: 8, 128>}, {transform_indices = @transform_1, window_bounds = array<i64: 8, 128>}, {transform_indices = @transform_2, window_bounds = array<i64: 1, 8, 128>}]} {
    %c0_i32 = arith.constant 0 : i32
    %0 = arith.cmpi eq, %arg1, %c0_i32 : i32
    %1 = arith.extui %0 : i1 to i32
    %c0_i32_0 = arith.constant 0 : i32
    %2 = arith.cmpi ne, %1, %c0_i32_0 : i32
    scf.if %2 {
      %cst_10 = arith.constant 0.000000e+00 : f32
      %15 = vector.broadcast %cst_10 : f32 to vector<8x128xf32>
      %c0_11 = arith.constant 0 : index
      %c0_12 = arith.constant 0 : index
      %16 = vector.load %arg5[%c0_11, %c0_12] : memref<8x128xf32, #tpu.memory_space<vmem>>, vector<8x128xf32>
      tpu.vector_store %arg5[%c0_11, %c0_12], %15 {strides = array<i32>} : memref<8x128xf32, #tpu.memory_space<vmem>>, vector<8x128xf32>,
    } else {
    }
    %c0 = arith.constant 0 : index
    %c0_1 = arith.constant 0 : index
    %3 = vector.load %arg2[%c0, %c0_1] : memref<8x128xf32, #tpu.memory_space<vmem>>, vector<8x128xf32>
    %c0_2 = arith.constant 0 : index
    %c0_3 = arith.constant 0 : index
    %4 = vector.load %arg3[%c0_2, %c0_3] : memref<8x128xf32, #tpu.memory_space<vmem>>, vector<8x128xf32>
    %5 = arith.subf %3, %4 : vector<8x128xf32>
    %6 = arith.mulf %5, %5 : vector<8x128xf32>
    %c0_4 = arith.constant 0 : index
    %c0_5 = arith.constant 0 : index
    %7 = vector.load %arg5[%c0_4, %c0_5] : memref<8x128xf32, #tpu.memory_space<vmem>>, vector<8x128xf32>
    %8 = vector.shape_cast %6 : vector<8x128xf32> to vector<1x8x128xf32>
    %cst = arith.constant dense<0.000000e+00> : vector<8x128xf32>
    %9 = vector.multi_reduction <add>, %8, %cst [0] : vector<1x8x128xf32> to vector<8x128xf32>
    %10 = arith.addf %7, %9 : vector<8x128xf32>
    %c0_6 = arith.constant 0 : index
    %c0_7 = arith.constant 0 : index
    %11 = vector.load %arg5[%c0_6, %c0_7] : memref<8x128xf32, #tpu.memory_space<vmem>>, vector<8x128xf32>
    tpu.vector_store %arg5[%c0_6, %c0_7], %10 {strides = array<i32>} : memref<8x128xf32, #tpu.memory_space<vmem>>, vector<8x128xf32>,
    %c0_i32_8 = arith.constant 0 : i32
    %12 = arith.cmpi eq, %arg1, %c0_i32_8 : i32
    %13 = arith.extui %12 : i1 to i32
    %c0_i32_9 = arith.constant 0 : i32
    %14 = arith.cmpi ne, %13, %c0_i32_9 : i32
    scf.if %14 {
      %c0_10 = arith.constant 0 : index
      %c0_11 = arith.constant 0 : index
      %15 = vector.load %arg5[%c0_10, %c0_11] : memref<8x128xf32, #tpu.memory_space<vmem>>, vector<8x128xf32>
      %16 = vector.shape_cast %15 : vector<8x128xf32> to vector<1x8x128xf32>
      %cst_12 = arith.constant dense<0.000000e+00> : vector<8x128xf32>
      %17 = vector.multi_reduction <add>, %16, %cst_12 [0] : vector<1x8x128xf32> to vector<8x128xf32>
      %18 = vector.shape_cast %17 : vector<8x128xf32> to vector<1x8x128xf32>
      %c0_13 = arith.constant 0 : index
      %c0_14 = arith.constant 0 : index
      %c0_15 = arith.constant 0 : index
      %19 = vector.load %arg4[%c0_13, %c0_14, %c0_15] : memref<1x8x128xf32, #tpu.memory_space<vmem>>, vector<1x8x128xf32>
      tpu.vector_store %arg4[%c0_13, %c0_14, %c0_15], %18 {strides = array<i32>} : memref<1x8x128xf32, #tpu.memory_space<vmem>>, vector<1x8x128xf32>,
    } else {
    }
    return
  }
  func.func @transform_0(%arg0: i32, %arg1: i32) -> (i32, i32) {
    %c1_i32 = arith.constant 1 : i32
    %0 = arith.muli %arg0, %c1_i32 : i32
    %1 = arith.addi %0, %arg1 : i32
    %c0_i32 = arith.constant 0 : i32
    %c0_i32_0 = arith.constant 0 : i32
    return %1, %c0_i32 : i32, i32
  }
  func.func @transform_1(%arg0: i32, %arg1: i32) -> (i32, i32) {
    %c1_i32 = arith.constant 1 : i32
    %0 = arith.muli %arg0, %c1_i32 : i32
    %1 = arith.addi %0, %arg1 : i32
    %c0_i32 = arith.constant 0 : i32
    %c0_i32_0 = arith.constant 0 : i32
    return %1, %c0_i32 : i32, i32
  }
  func.func @transform_2(%arg0: i32, %arg1: i32) -> (i32, i32, i32) {
    %c0_i32 = arith.constant 0 : i32
    %c0_i32_0 = arith.constant 0 : i32
    %c0_i32_1 = arith.constant 0 : i32
    return %arg0, %c0_i32, %c0_i32_0 : i32, i32, i32
  }
}

</mosaic_0001>

<llo_original>
// kernel: tpu_custom_call.1
$region0: #{tpu_custom_call.1}
  #allocation0 [shape = 'u32[]', space=smem, size = 0x4, offset = 0x4, fixed_abs, tag = 'smem constant byte address 0x4 - core index']
  #allocation1 [shape = 'u32[72,128]{1,0:T(1,128)}', space=vmem, size = 0x9000, scoped, tag = 'internal scratch']
  #allocation2 [shape = 'f32[8,128]{1,0:T(8,128)}', space=vmem, size = 0x1000, scoped, tag = 'scratch operand']
  %s0 = inlined_call_operand.hbm [shape: f32[16,128], index: 0, kind: input, shape index: {}]
  %s1 = inlined_call_operand.hbm [shape: f32[16,128], index: 1, kind: input, shape index: {}]
  %s2 = inlined_call_operand.hbm [shape: f32[2,8,128], index: 2, kind: output, shape index: {}]
  %s3 = sld [smem:[#allocation0]]
  $region57: #{tpu_custom_call.1} parent=0
    _
  %s5 = ssub.s32 1, %s3
  %s6 = scalar_select 0, %s5, %s3
  $region1: #{tpu_custom_call.1} parent=0
    #allocation3 [shape = 'u8[8192]{0}', space=vmem, size = 0x2000, scoped, tag = 'input window, operand 0']
    #allocation4 [shape = 's32[2]{0}', space=sflag, size = 0x8, scoped, tag = 'scoped memory for tpu_custom_call.1']
    #allocation5 [shape = 's32[2]{0}', space=sflag, size = 0x8, scoped, tag = 'scoped memory for tpu_custom_call.1']
    #allocation6 [shape = 'u8[8192]{0}', space=vmem, size = 0x2000, scoped, tag = 'input window, operand 1']
    #allocation7 [shape = 's32[2]{0}', space=sflag, size = 0x8, scoped, tag = 'scoped memory for tpu_custom_call.1']
    #allocation8 [shape = 'u8[8192]{0}', space=vmem, size = 0x2000, scoped, tag = 'output window, operand 0']
    %7 = vsyncpa [#allocation4], 0
    %s8 = scalar_lea.sflag [#allocation4], 1
    %9 = vsyncpa %s8, 0
    %10 = vsyncpa [#allocation7], 0
    %s11 = scalar_lea.sflag [#allocation7], 1
    %12 = vsyncpa %s11, 0
    %13 = vsyncpa [#allocation5], 0
    %s14 = scalar_lea.sflag [#allocation5], 1
    %15 = vsyncpa %s14, 0
    loop: start=0, step=1, limit=4
    $region2: #{tpu_custom_call.1} parent=1 // loop_pre_header
      _
    $region3: #{tpu_custom_call.1} parent=1 // loop_header
      %s17 = sphi 0, %s21
      %p18 = scmp.ge.s32.totalorder %s17, 4
      %s24 = sphi 0, %s36
      %s25 = sphi 0, %s32
      %s26 = sphi 0, %s24
      %s27 = sphi 0, %s25
      %s28 = sphi 0, %s26
      %s29 = sphi 0, %s27
      %s41 = sphi 0, %s43
      %s44 = sphi 0, %s41
      %s45 = sphi 0, %s44
      %s61 = sphi 0, %s45
      %s69 = sphi 0, %s71
      %s72 = sphi 0, %s69
      %s73 = sphi 0, %s72
      %s89 = sphi 0, %s73
      %s95 = sphi 0, %s97
      %s98 = sphi 0, %s95
      %s99 = sphi 0, %s98
      %s115 = sphi 0, %s99
    $region4: #{tpu_custom_call.1} parent=1 // loop_header_branch
      %20 = sbr.rel (%p18) target = $region8
    $region5: #{tpu_custom_call.1} parent=1 // loop_body
      %s22 = ssub.s32 %s17, 1
      %s23 = ssub.s32 %s17, 2
      %s30 = sadd.s32 1, %s25
      %p31 = scmp.ge.s32.totalorder %s30, 1
      %s32 = scalar_select %p31, 0, %s30
      %s33 = sadd.s32 1, %s24
      %s34 = scalar_select %p31, %s33, %s24
      %p35 = scmp.ge.s32.totalorder %s34, 2
      %s36 = scalar_select %p35, 0, %s34
      %s37 = sadd.s32 %s24, %s25
      %s38 = sadd.s32 %s36, %s32
      %s39 = ssub.s32 %s37, %s38
      %p40 = scmp.eq.s32.totalorder %s39, 0
      %s42 = sadd.s32 %s41, 1
      %s43 = scalar_select %p40, %s41, %s42
      %p46 = pneg %p40
      %p47 = scmp.eq.s32.totalorder %s17, 1
      %p48 = por %p46, %p47
      %p49 = scmp.ne.s32.totalorder %s41, %s44
      %p50 = scmp.eq.s32.totalorder %s17, 0
      %p51 = por %p49, %p50
      %p52 = scmp.ne.s32.totalorder %s41, %s44
      %p53 = scmp.eq.s32.totalorder %s22, 1
      %p54 = por %p52, %p53
      %p55 = scmp.ne.s32.totalorder %s44, %s45
      %p56 = scmp.eq.s32.totalorder %s22, 0
      %p57 = por %p55, %p56
      %p58 = scmp.ne.s32.totalorder %s44, %s45
      %p59 = scmp.eq.s32.totalorder %s23, 1
      %p60 = por %p58, %p59
      %p62 = scmp.ne.s32.totalorder %s45, %s61
      %p63 = scmp.eq.s32.totalorder %s23, 0
      %p64 = por %p62, %p63
      %s65 = sadd.s32 %s24, %s25
      %s66 = sadd.s32 %s36, %s32
      %s67 = ssub.s32 %s65, %s66
      %p68 = scmp.eq.s32.totalorder %s67, 0
      %s70 = sadd.s32 %s69, 1
      %s71 = scalar_select %p68, %s69, %s70
      %p74 = pneg %p68
      %p75 = scmp.eq.s32.totalorder %s17, 1
      %p76 = por %p74, %p75
      %p77 = scmp.ne.s32.totalorder %s69, %s72
      %p78 = scmp.eq.s32.totalorder %s17, 0
      %p79 = por %p77, %p78
      %p80 = scmp.ne.s32.totalorder %s69, %s72
      %p81 = scmp.eq.s32.totalorder %s22, 1
      %p82 = por %p80, %p81
      %p83 = scmp.ne.s32.totalorder %s72, %s73
      %p84 = scmp.eq.s32.totalorder %s22, 0
      %p85 = por %p83, %p84
      %p86 = scmp.ne.s32.totalorder %s72, %s73
      %p87 = scmp.eq.s32.totalorder %s23, 1
      %p88 = por %p86, %p87
      %p90 = scmp.ne.s32.totalorder %s73, %s89
      %p91 = scmp.eq.s32.totalorder %s23, 0
      %p92 = por %p90, %p91
      %s93 = ssub.s32 %s24, %s36
      %p94 = scmp.eq.s32.totalorder %s93, 0
      %s96 = sadd.s32 %s95, 1
      %s97 = scalar_select %p94, %s95, %s96
      %p100 = pneg %p94
      %p101 = scmp.eq.s32.totalorder %s17, 1
      %p102 = por %p100, %p101
      %p103 = scmp.ne.s32.totalorder %s95, %s98
      %p104 = scmp.eq.s32.totalorder %s17, 0
      %p105 = por %p103, %p104
      %p106 = scmp.ne.s32.totalorder %s95, %s98
      %p107 = scmp.eq.s32.totalorder %s22, 1
      %p108 = por %p106, %p107
      %p109 = scmp.ne.s32.totalorder %s98, %s99
      %p110 = scmp.eq.s32.totalorder %s22, 0
      %p111 = por %p109, %p110
      %p112 = scmp.ne.s32.totalorder %s98, %s99
      %p113 = scmp.eq.s32.totalorder %s23, 1
      %p114 = por %p112, %p113
      %p116 = scmp.ne.s32.totalorder %s99, %s115
      %p117 = scmp.eq.s32.totalorder %s23, 0
      %p118 = por %p116, %p117
      %p119 = scmp.le.s32.totalorder 1, %s17
      %p120 = scmp.lt.s32.totalorder %s17, 3
      %p121 = pnand %p119, %p120
      %p122 = pneg %p121
      // Predicated region
      $region9: #{tpu_custom_call.1} parent=5 // pred_check
        _
      $region10: #{tpu_custom_call.1} parent=5 // pred_check_branch
        %124 = sbr.rel (%p121) target = $region12
      $region11: #{tpu_custom_call.1} parent=5 // pred_region
        %s125 = ssub.s32 %s17, 1
      $region12: #{tpu_custom_call.1} parent=5 // pred_fallthru
        _
      %p126 = scmp.lt.s32.totalorder %s17, 2
      // Predicated region
      $region13: #{tpu_custom_call.1} parent=5 // pred_check
        %p127 = pneg %p126
      $region14: #{tpu_custom_call.1} parent=5 // pred_check_branch
        %129 = sbr.rel (%p127) target = $region16
      $region15: #{tpu_custom_call.1} parent=5 // pred_region
        // Predicated region
        $region17: #{tpu_custom_call.1} parent=15 // pred_check
          %p130 = pneg %p51
        $region18: #{tpu_custom_call.1} parent=15 // pred_check_branch
          %132 = sbr.rel (%p130) target = $region20
        $region19: #{tpu_custom_call.1} parent=15 // pred_region
          %s133 = sand.u32 %s41, 1
          %s134 = scalar_lea.sflag [#allocation4], %s133
          %s135 = sand.u32 %s41, 1
          %s136 = smul.addr %s135, 8
          %s137 = scalar_lea.vmem [#allocation3], %s136
          %s138 = sadd.s32 %s24, %s25
          %140 = vsyncadd %s134, 0
          %s141 = smul.addr %s138, 8
          %s142 = scalar_lea.hbm %s0, %s141
          %s144 = sshll.u32 %s142, 4
          %s145 = int_to_ptr.hbm [resolvable:$true] %s144
          %s146 = sshll.u32 %s137, 4
          %s147 = int_to_ptr.vmem [resolvable:$true] %s146
          %149 = dma.hbm_to_vmem [thread:$0]  %s145, 128, %s147, %s134
        $region20: #{tpu_custom_call.1} parent=15 // pred_fallthru
          _
        // Predicated region
        $region21: #{tpu_custom_call.1} parent=15 // pred_check
          %p150 = pneg %p79
        $region22: #{tpu_custom_call.1} parent=15 // pred_check_branch
          %152 = sbr.rel (%p150) target = $region24
        $region23: #{tpu_custom_call.1} parent=15 // pred_region
          %s153 = sand.u32 %s69, 1
          %s154 = scalar_lea.sflag [#allocation7], %s153
          %s155 = sand.u32 %s69, 1
          %s156 = smul.addr %s155, 8
          %s157 = scalar_lea.vmem [#allocation6], %s156
          %s158 = sadd.s32 %s24, %s25
          %160 = vsyncadd %s154, 0
          %s161 = smul.addr %s158, 8
          %s162 = scalar_lea.hbm %s1, %s161
          %s164 = sshll.u32 %s162, 4
          %s165 = int_to_ptr.hbm [resolvable:$true] %s164
          %s166 = sshll.u32 %s157, 4
          %s167 = int_to_ptr.vmem [resolvable:$true] %s166
          %169 = dma.hbm_to_vmem [thread:$0]  %s165, 128, %s167, %s154
        $region24: #{tpu_custom_call.1} parent=15 // pred_fallthru
          _
      $region16: #{tpu_custom_call.1} parent=5 // pred_fallthru
        _
      %p170 = scmp.le.s32.totalorder 1, %s17
      %p171 = scmp.lt.s32.totalorder %s17, 3
      %p172 = pnand %p170, %p171
      %p173 = pneg %p172
      // Predicated region
      $region25: #{tpu_custom_call.1} parent=5 // pred_check
        _
      $region26: #{tpu_custom_call.1} parent=5 // pred_check_branch
        %175 = sbr.rel (%p172) target = $region28
      $region27: #{tpu_custom_call.1} parent=5 // pred_region
        %s176 = ssub.s32 %s17, 1
        %s177 = sand.u32 %s44, 1
        %s178 = scalar_lea.sflag [#allocation4], %s177
        %s179 = sand.u32 %s44, 1
        %s180 = smul.addr %s179, 8
        %s181 = scalar_lea.vmem [#allocation3], %s180
        // Predicated region
        $region29: #{tpu_custom_call.1} parent=27 // pred_check
          %p182 = pneg %p57
        $region30: #{tpu_custom_call.1} parent=27 // pred_check_branch
          %184 = sbr.rel (%p182) target = $region32
        $region31: #{tpu_custom_call.1} parent=27 // pred_region
          %186 = dma.done %s178, 128
        $region32: #{tpu_custom_call.1} parent=27 // pred_fallthru
          _
        %s187 = sand.u32 %s72, 1
        %s188 = scalar_lea.sflag [#allocation7], %s187
        %s189 = sand.u32 %s72, 1
        %s190 = smul.addr %s189, 8
        %s191 = scalar_lea.vmem [#allocation6], %s190
        // Predicated region
        $region33: #{tpu_custom_call.1} parent=27 // pred_check
          %p192 = pneg %p85
        $region34: #{tpu_custom_call.1} parent=27 // pred_check_branch
          %194 = sbr.rel (%p192) target = $region36
        $region35: #{tpu_custom_call.1} parent=27 // pred_region
          %196 = dma.done %s188, 128
        $region36: #{tpu_custom_call.1} parent=27 // pred_fallthru
          _
        %s197 = sand.u32 %s44, 1
        %s198 = scalar_lea.sflag [#allocation4], %s197
        %s199 = sand.u32 %s44, 1
        %s200 = smul.addr %s199, 8
        %s201 = scalar_lea.vmem [#allocation3], %s200
        %p202 = pneg %p57
        %p203 = pneg %p54
        %s204 = sand.u32 %s72, 1
        %s205 = scalar_lea.sflag [#allocation7], %s204
        %s206 = sand.u32 %s72, 1
        %s207 = smul.addr %s206, 8
        %s208 = scalar_lea.vmem [#allocation6], %s207
        %p209 = pneg %p85
        %p210 = pneg %p82
        %p211 = pneg %p111
        %p212 = pneg %p108
        %s213 = sand.u32 %s98, 1
        %s214 = scalar_lea.sflag [#allocation5], %s213
        %s215 = sand.u32 %s98, 1
        %s216 = smul.addr %s215, 8
        %s217 = scalar_lea.vmem [#allocation8], %s216
        %s218 = sadd.s32 %s26, %s27
        %s219 = sadd.s32 %s26, %s27
        %p220 = scmp.eq.s32.totalorder %s27, 0
        // Predicated region
        $region37: #{tpu_custom_call.1} parent=27 // pred_check
          %p221 = pneg %p220
        $region38: #{tpu_custom_call.1} parent=27 // pred_check_branch
          %223 = sbr.rel (%p221) target = $region40
        $region39: #{tpu_custom_call.1} parent=27 // pred_region
          %224 = vst [vmem:[#allocation2] sm:$0xff] 0.0
        $region40: #{tpu_custom_call.1} parent=27 // pred_fallthru
          _
        %v225 = vld [vmem:[%s181] sm:$0xff]
        %v226 = vld [vmem:[%s191] sm:$0xff]
        %v227 = vsub.f32 %v225, %v226
        %v228 = vmul.f32 %v227, %v227
        %v229 = vld [vmem:[#allocation2] sm:$0xff]
        %v230 = vadd.f32 %v228, 0.0
        %v231 = vadd.f32 %v229, %v230
        %232 = vst [vmem:[#allocation2] sm:$0xff] %v231
        // Predicated region
        $region41: #{tpu_custom_call.1} parent=27 // pred_check
          %p233 = pneg %p220
        $region42: #{tpu_custom_call.1} parent=27 // pred_check_branch
          %235 = sbr.rel (%p233) target = $region44
        $region43: #{tpu_custom_call.1} parent=27 // pred_region
          %v236 = vld [vmem:[#allocation2] sm:$0xff]
          %v237 = vadd.f32 %v236, 0.0
          %238 = vst [vmem:[%s217] sm:$0xff] %v237
        $region44: #{tpu_custom_call.1} parent=27 // pred_fallthru
          _
        %s239 = sand.u32 %s98, 1
        %s240 = scalar_lea.sflag [#allocation5], %s239
        %s241 = sand.u32 %s98, 1
        %s242 = smul.addr %s241, 8
        %s243 = scalar_lea.vmem [#allocation8], %s242
        // Predicated region
        $region45: #{tpu_custom_call.1} parent=27 // pred_check
          %p244 = pneg %p108
        $region46: #{tpu_custom_call.1} parent=27 // pred_check_branch
          %246 = sbr.rel (%p244) target = $region48
        $region47: #{tpu_custom_call.1} parent=27 // pred_region
          %248 = vsyncadd %s240, 0
          %s249 = smul.addr %s26, 8
          %s250 = scalar_lea.hbm %s2, %s249
          %s252 = sshll.u32 %s243, 4
          %s253 = int_to_ptr.vmem [resolvable:$true] %s252
          %s254 = sshll.u32 %s250, 4
          %s255 = int_to_ptr.hbm [resolvable:$true] %s254
          %257 = dma.vmem_to_hbm [thread:$0]  %s253, 128, %s255, %s240
        $region48: #{tpu_custom_call.1} parent=27 // pred_fallthru
          _
      $region28: #{tpu_custom_call.1} parent=5 // pred_fallthru
        _
      %p258 = scmp.le.s32.totalorder 2, %s17
      // Predicated region
      $region49: #{tpu_custom_call.1} parent=5 // pred_check
        %p259 = pneg %p258
      $region50: #{tpu_custom_call.1} parent=5 // pred_check_branch
        %261 = sbr.rel (%p259) target = $region52
      $region51: #{tpu_custom_call.1} parent=5 // pred_region
        %s262 = ssub.s32 %s17, 2
        // Predicated region
        $region53: #{tpu_custom_call.1} parent=51 // pred_check
          %p263 = pneg %p114
        $region54: #{tpu_custom_call.1} parent=51 // pred_check_branch
          %265 = sbr.rel (%p263) target = $region56
        $region55: #{tpu_custom_call.1} parent=51 // pred_region
          %s266 = sand.u32 %s99, 1
          %s267 = scalar_lea.sflag [#allocation5], %s266
          %s268 = sand.u32 %s99, 1
          %s269 = smul.addr %s268, 8
          %s270 = scalar_lea.vmem [#allocation8], %s269
          %272 = dma.done %s267, 128
        $region56: #{tpu_custom_call.1} parent=51 // pred_fallthru
          _
      $region52: #{tpu_custom_call.1} parent=5 // pred_fallthru
        _
    $region6: #{tpu_custom_call.1} parent=1 // loop_footer
      %s21 = sadd.s32 1, %s17
    $region7: #{tpu_custom_call.1} parent=1 // loop_footer_branch
      %16 = sbr.rel target = $region3
    $region8: #{tpu_custom_call.1} parent=1 // loop_exit
      _
    %273 = vsyncpa [#allocation4], 1
    %s274 = scalar_lea.sflag [#allocation4], 1
    %275 = vsyncpa %s274, 1
    %276 = vsyncpa [#allocation7], 1
    %s277 = scalar_lea.sflag [#allocation7], 1
    %278 = vsyncpa %s277, 1
    %279 = vsyncpa [#allocation5], 1
    %s280 = scalar_lea.sflag [#allocation5], 1
    %281 = vsyncpa %s280, 1

</llo_original>
